<compile_context>
chip_gen: v6e
topology: v6e:2x2x1
jax: 0.10.0
libtpu: 0.0.40
codegen_flags: <defaults>
</compile_context>

<pallas_src>
import math
import functools

import jax
import jax.numpy as jnp
from jax.experimental import pallas as pl
from jax.experimental.pallas import tpu as pltpu


# ----------------------------------------------------------------------------
# Kernel
# ----------------------------------------------------------------------------
def hash_margin_kernel(x_ref, wnt_ref, label_ref, o_ref, *, m):
    # x arrives in its storage dtype (bf16/f32); cast in-register, not in HBM.
    x = x_ref[...].astype(jnp.float32)            # (TB, D)
    wnt = wnt_ref[...]                            # (D, C) f32, pre-normalized, pre-transposed
    lab = label_ref[...]                          # (TB, 1) int32

    # Natural (M,K)x(K,N) MXU matmul, f32 accumulation.
    dot = jnp.dot(x, wnt, preferred_element_type=jnp.float32)        # (TB, C)

    # Row L2 norm — only needed for the margin correction on the label column.
    # (Padded rows of a partial last tile may hold stale data; they are never
    #  written back because the output block is clipped to B rows.)
    feat_norm = jnp.sqrt(jnp.sum(x * x, axis=1, keepdims=True))      # (TB, 1)

    # out = x @ wn.T - m * ||x|| * onehot, as a single masked subtract.
    col = jax.lax.broadcasted_iota(jnp.int32, dot.shape, 1)          # (TB, C)
    out = dot - jnp.where(col == lab, m * feat_norm, jnp.float32(0.0))
    o_ref[...] = out.astype(o_ref.dtype)


# ----------------------------------------------------------------------------
# Wrapper
# ----------------------------------------------------------------------------
def _round_up(n, mult):
    return ((n + mult - 1) // mult) * mult


def _vmem_budget_bytes():
    """(block budget, vmem_limit) per TPU generation."""
    try:
        kind = jax.devices()[0].device_kind.lower()
    except Exception:
        kind = ""
    if "v7" in kind:
        # v7x: 64 MiB physical VMEM per TensorCore — keep headroom.
        return 24 << 20, 48 << 20
    # v4 / v5e / v5p / v6e: 128 MiB physical VMEM (v5e scoped default is only
    # 16 MiB, so the explicit vmem_limit_bytes below is what unlocks big tiles).
    return 56 << 20, 96 << 20


def _derive_tb(B, x_dtype, out_dtype, block_budget):
    """Largest batch tile whose double-buffered blocks fit the VMEM budget.

    Lane padding: x (tb, D<=128), label (tb, 1) and out (tb, 10) all pad their
    last dim to 128 lanes in VMEM; double buffering doubles each.
    """
    lanes = 128
    x_row = 2 * lanes * jnp.dtype(x_dtype).itemsize      # x block
    lab_row = 2 * lanes * 4                               # (tb, 1) int32
    out_row = 2 * lanes * jnp.dtype(out_dtype).itemsize   # (tb, C) output
    per_row = x_row + lab_row + out_row
    tb = max(8, (block_budget // per_row) // 8 * 8)
    return int(min(tb, _round_up(B, 8)))


def hash_margin_forward(x, weight, label, m=0.4, *, force_pallas=False):
    B, D = x.shape
    C, D2 = weight.shape
    assert D == D2
    assert C == 10, "Hash_Margin hard-codes 10 classes for the one-hot label"

    out_dtype = x.dtype

    # Hoisted weight normalization + transpose: once per call, not per step.
    w32 = weight.astype(jnp.float32)
    w_norm = jnp.sqrt(jnp.sum(w32 * w32, axis=1, keepdims=True))
    wn_t = (w32 / jnp.maximum(w_norm, 1e-12)).T            # (D, C) f32

    # Small-B fallback: pallas_call launch/pipeline overhead dwarfs the work;
    # XLA fuses this 3-op expression trivially.
    if B < 1024 and not force_pallas:
        xf = x.astype(jnp.float32)
        fnorm = jnp.sqrt(jnp.sum(xf * xf, axis=1, keepdims=True))
        onehot = jax.nn.one_hot(label, C, dtype=jnp.float32)
        return (xf @ wn_t - m * fnorm * onehot).astype(out_dtype)

    label2d = label.astype(jnp.int32).reshape(B, 1)

    block_budget, vmem_limit = _vmem_budget_bytes()
    tb = _derive_tb(B, x.dtype, out_dtype, block_budget)
    grid = (pl.cdiv(B, tb),)

    x_bytes = B * D * jnp.dtype(x.dtype).itemsize
    out_bytes = B * C * jnp.dtype(out_dtype).itemsize
    cost = pl.CostEstimate(
        flops=2 * B * D * C + 3 * B * D + 2 * B * C,
        transcendentals=B,                                   # per-row sqrt
        bytes_accessed=x_bytes + 4 * D * C + 4 * B + out_bytes,
    )

    kernel = functools.partial(hash_margin_kernel, m=float(m))
    return pl.pallas_call(
        kernel,
        out_shape=jax.ShapeDtypeStruct((B, C), out_dtype),
        grid=grid,
        in_specs=[
            pl.BlockSpec((tb, D), lambda i: (i, 0)),   # x streamed in storage dtype
            pl.BlockSpec((D, C), lambda i: (0, 0)),    # normalized W^T, resident
            pl.BlockSpec((tb, 1), lambda i: (i, 0)),   # labels tile (int32)
        ],
        out_specs=pl.BlockSpec((tb, C), lambda i: (i, 0)),
        compiler_params=pltpu.CompilerParams(
            dimension_semantics=("parallel",),         # shard batch across TCs (v7x)
            vmem_limit_bytes=vmem_limit,
        ),
        cost_estimate=cost,
    )(x, wn_t, label2d)


# ----------------------------------------------------------------------------
# Self-test
# ----------------------------------------------------------------------------
if __name__ == "__main__":
    # Small shapes consistent with the module: in_features=32, out_features=10, batch=8
    B, D, C = 8, 32, 10
    m = 0.4

    key = jax.random.PRNGKey(0)
    kx, kw, kl = jax.random.split(key, 3)

    x = jax.random.normal(kx, (B, D), dtype=jnp.float32)
    label = jax.random.randint(kl, (B,), 0, C, dtype=jnp.int32)

    # Deterministic xavier_uniform_ init for weight (out_features, in_features)
    limit = math.sqrt(6.0 / (D + C))
    weight = jax.random.uniform(kw, (C, D), dtype=jnp.float32,
                                minval=-limit, maxval=limit)

    # force_pallas=True so the Pallas path is exercised even at tiny B.
    out = hash_margin_forward(x, weight, label, m=m, force_pallas=True)
    jax.block_until_ready(out)

    # Pure-JAX reference (original un-folded math).
    fnorm = jnp.sqrt(jnp.sum(x * x, axis=1, keepdims=True))
    xn = x / jnp.maximum(fnorm, 1e-12)
    wn = weight / jnp.maximum(
        jnp.sqrt(jnp.sum(weight * weight, axis=1, keepdims=True)), 1e-12)
    cosine = xn @ wn.T
    onehot = jax.nn.one_hot(label, C, dtype=jnp.float32)
    ref = (onehot * (cosine - m) + (1.0 - onehot) * cosine) * fnorm
    assert jnp.allclose(out.astype(jnp.float32), ref, atol=2e-5, rtol=1e-5), \
        "mismatch vs reference"

    print("KERNEL_OK")
</pallas_src>

<mosaic_0001>
module attributes {stable_mosaic.version = 11 : i64} {
  func.func @hash_margin_kernel(%arg0: i32, %arg1: memref<8x32xf32, #tpu.memory_space<vmem>>, %arg2: memref<32x10xf32, #tpu.memory_space<vmem>>, %arg3: memref<8x1xi32, #tpu.memory_space<vmem>>, %arg4: memref<8x10xf32, #tpu.memory_space<vmem>>) attributes {dimension_semantics = [#tpu.dimension_semantics<parallel>], iteration_bounds = array<i64: 1>, scalar_prefetch = 0 : i64, scratch_operands = 0 : i64, tpu.core_type = #tpu.core_type<tc>, window_params = [{transform_indices = @transform_0, window_bounds = array<i64: 8, 32>}, {pipeline_mode = #tpu.pipeline_mode<synchronous>, transform_indices = @transform_1, window_bounds = array<i64: 32, 10>}, {transform_indices = @transform_2, window_bounds = array<i64: 8, 1>}, {transform_indices = @transform_3, window_bounds = array<i64: 8, 10>}]} {
    %c0 = arith.constant 0 : index
    %c0_0 = arith.constant 0 : index
    %0 = vector.load %arg1[%c0, %c0_0] : memref<8x32xf32, #tpu.memory_space<vmem>>, vector<8x32xf32>
    %c0_1 = arith.constant 0 : index
    %c0_2 = arith.constant 0 : index
    %1 = vector.load %arg2[%c0_1, %c0_2] : memref<32x10xf32, #tpu.memory_space<vmem>>, vector<32x10xf32>
    %c0_3 = arith.constant 0 : index
    %c0_4 = arith.constant 0 : index
    %2 = vector.load %arg3[%c0_3, %c0_4] : memref<8x1xi32, #tpu.memory_space<vmem>>, vector<8x1xi32>
    %cst = arith.constant dense<0.000000e+00> : vector<8x10xf32>
    %3 = tpu.matmul %0, %1, %cst {dimension_numbers = #tpu.dot_dimension_numbers<[1], [0], [0], [1], [0, 0, 1, 1], [], []>} : vector<8x32xf32>, vector<32x10xf32>, vector<8x10xf32> -> vector<8x10xf32>
    %4 = arith.mulf %0, %0 : vector<8x32xf32>
    %cst_5 = arith.constant dense<0.000000e+00> : vector<8xf32>
    %5 = vector.multi_reduction <add>, %4, %cst_5 [1] : vector<8x32xf32> to vector<8xf32>
    %6 = vector.shape_cast %5 : vector<8xf32> to vector<8x1xf32>
    %7 = math.sqrt %6 : vector<8x1xf32>
    %8 = tpu.iota {dimensions = array<i32: 1>} : vector<8x10xi32>
    %9 = vector.broadcast %2 : vector<8x1xi32> to vector<8x10xi32>
    %10 = arith.cmpi eq, %8, %9 : vector<8x10xi32>
    %cst_6 = arith.constant 4.000000e-01 : f32
    %11 = vector.broadcast %cst_6 : f32 to vector<8x1xf32>
    %12 = arith.mulf %11, %7 : vector<8x1xf32>
    %cst_7 = arith.constant 0.000000e+00 : f32
    %13 = vector.shape_cast %12 : vector<8x1xf32> to vector<8x1xf32>
    %14 = vector.broadcast %13 : vector<8x1xf32> to vector<8x10xf32>
    %15 = vector.broadcast %cst_7 : f32 to vector<8x10xf32>
    %16 = arith.select %10, %14, %15 : vector<8x10xi1>, vector<8x10xf32>
    %17 = arith.subf %3, %16 : vector<8x10xf32>
    %c0_8 = arith.constant 0 : index
    %c0_9 = arith.constant 0 : index
    %18 = vector.load %arg4[%c0_8, %c0_9] : memref<8x10xf32, #tpu.memory_space<vmem>>, vector<8x10xf32>
    tpu.vector_store %arg4[%c0_8, %c0_9], %17 {strides = array<i32>} : memref<8x10xf32, #tpu.memory_space<vmem>>, vector<8x10xf32>,
    return
  }
  func.func @transform_0(%arg0: i32) -> (i32, i32) {
    %c0_i32 = arith.constant 0 : i32
    %c0_i32_0 = arith.constant 0 : i32
    return %arg0, %c0_i32 : i32, i32
  }
  func.func @transform_1(%arg0: i32) -> (i32, i32) {
    %c0_i32 = arith.constant 0 : i32
    %c0_i32_0 = arith.constant 0 : i32
    %c0_i32_1 = arith.constant 0 : i32
    return %c0_i32, %c0_i32_0 : i32, i32
  }
  func.func @transform_2(%arg0: i32) -> (i32, i32) {
    %c0_i32 = arith.constant 0 : i32
    %c0_i32_0 = arith.constant 0 : i32
    return %arg0, %c0_i32 : i32, i32
  }
  func.func @transform_3(%arg0: i32) -> (i32, i32) {
    %c0_i32 = arith.constant 0 : i32
    %c0_i32_0 = arith.constant 0 : i32
    return %arg0, %c0_i32 : i32, i32
  }
}

</mosaic_0001>

<llo_original>
// kernel: tpu_custom_call.1
$region0: #{tpu_custom_call.1}
  #allocation0 [shape = 'u32[]', space=smem, size = 0x4, offset = 0x4, fixed_abs, tag = 'smem constant byte address 0x4 - core index']
  #allocation1 [shape = 'u32[144,128]{1,0:T(1,128)}', space=vmem, size = 0x12000, scoped, tag = 'internal scratch']
  %s0 = inlined_call_operand.vmem [shape: f32[8,32], index: 0, kind: input, shape index: {}]
  %s1 = inlined_call_operand.vmem [shape: f32[32,10], index: 1, kind: input, shape index: {}]
  %s2 = inlined_call_operand.vmem [shape: s32[8,1], index: 2, kind: input, shape index: {}]
  %s3 = inlined_call_operand.hbm [shape: f32[8,10], index: 3, kind: output, shape index: {}]
  %s4 = sld [smem:[#allocation0]]
  $region22: #{tpu_custom_call.1} parent=0
    _
  %s6 = ssub.s32 1, %s4
  %s7 = scalar_select 0, %s6, %s4
  $region1: #{tpu_custom_call.1} parent=0
    #allocation2 [shape = 'u8[4096]{0}', space=vmem, size = 0x1000, scoped, tag = 'output window, operand 0, single buffered']
    #allocation3 [shape = 's32[1]{0}', space=sflag, size = 0x4, scoped, tag = 'scoped memory for tpu_custom_call.1']
    %8 = vsyncpa [#allocation3], 0
    // Predicated region
    $region2: #{tpu_custom_call.1} parent=1 // pred_check
      _
    $region3: #{tpu_custom_call.1} parent=1 // pred_check_branch
      %10 = sbr.rel (0) target = $region5
    $region4: #{tpu_custom_call.1} parent=1 // pred_region
      _
    $region5: #{tpu_custom_call.1} parent=1 // pred_fallthru
      _
    // Predicated region
    $region6: #{tpu_custom_call.1} parent=1 // pred_check
      _
    $region7: #{tpu_custom_call.1} parent=1 // pred_check_branch
      %12 = sbr.rel (0) target = $region9
    $region8: #{tpu_custom_call.1} parent=1 // pred_region
      _
    $region9: #{tpu_custom_call.1} parent=1 // pred_fallthru
      _
    // Predicated region
    $region10: #{tpu_custom_call.1} parent=1 // pred_check
      _
    $region11: #{tpu_custom_call.1} parent=1 // pred_check_branch
      %14 = sbr.rel (0) target = $region13
    $region12: #{tpu_custom_call.1} parent=1 // pred_region
      _
    $region13: #{tpu_custom_call.1} parent=1 // pred_fallthru
      _
    %v15 = vld [vmem:[%s0] sm:$0xff]
    %v16 = vld [vmem:[%s1] sm:$0xff]
    %v17 = vld [vmem:[%s1 + $0x8] sm:$0xff]
    %v18 = vld [vmem:[%s1 + $0x10] sm:$0xff]
    %v19 = vld [vmem:[%s1 + $0x18] sm:$0xff]
    %v20 = vld [vmem:[%s2] sm:$0xff]
    %vm21 = vcmask 261120
    %v23 = vsel %vm21, %v15, 0
    %25 = vmatprep.subr.mxu0 0.0
    %26 = vmatpush1.msra.mxu0 0.0
    %27 = vmatprep.subr.mxu0 0.0
    %28 = vmatpush1.msra.mxu0 0.0
    %29 = vmatprep.subr.mxu0 0.0
    %30 = vmatpush1.msra.mxu0 0.0
    %31 = vmatprep.subr.mxu0 0.0
    %32 = vmatpush1.msra.mxu0 0.0
    %33 = vmatprep.subr.mxu0 0.0
    %34 = vmatpush1.msra.mxu0 0.0
    %35 = vmatprep.subr.mxu0 0.0
    %36 = vmatpush1.msra.mxu0 0.0
    %37 = vmatprep.subr.mxu0 0.0
    %38 = vmatpush1.msra.mxu0 0.0
    %39 = vmatprep.subr.mxu0 0.0
    %40 = vmatpush1.msra.mxu0 0.0
    %41 = vmatprep.subr.mxu0 0.0
    %42 = vmatpush1.msra.mxu0 0.0
    %43 = vmatprep.subr.mxu0 0.0
    %44 = vmatpush1.msra.mxu0 0.0
    %45 = vmatprep.subr.mxu0 0.0
    %46 = vmatpush1.msra.mxu0 0.0
    %47 = vmatprep.subr.mxu0 0.0
    %48 = vmatpush1.msra.mxu0 0.0
    %49 = vmatprep.subr.mxu0 0.0
    %50 = vmatpush1.msra.mxu0 %v19
    %51 = vmatprep.subr.mxu0 0.0
    %52 = vmatpush1.msra.mxu0 %v18
    %53 = vmatprep.subr.mxu0 0.0
    %54 = vmatpush1.msra.mxu0 %v17
    %55 = vmatprep.subr.mxu0 0.0
    %56 = vmatpush1.msra.mxu0 %v16
    %57 = vmatprep.subr.mxu0 0.0
    %58 = vmatpush2.msra.mxu0 0.0
    %59 = vmatprep.subr.mxu0 0.0
    %60 = vmatpush2.msra.mxu0 0.0
    %61 = vmatprep.subr.mxu0 0.0
    %62 = vmatpush2.msra.mxu0 0.0
    %63 = vmatprep.subr.mxu0 0.0
    %64 = vmatpush2.msra.mxu0 0.0
    %65 = vmatprep.subr.mxu0 0.0
    %66 = vmatpush2.msra.mxu0 0.0
    %67 = vmatprep.subr.mxu0 0.0
    %68 = vmatpush2.msra.mxu0 0.0
    %69 = vmatprep.subr.mxu0 0.0
    %70 = vmatpush2.msra.mxu0 0.0
    %71 = vmatprep.subr.mxu0 0.0
    %72 = vmatpush2.msra.mxu0 0.0
    %73 = vmatprep.subr.mxu0 0.0
    %74 = vmatpush2.msra.mxu0 0.0
    %75 = vmatprep.subr.mxu0 0.0
    %76 = vmatpush2.msra.mxu0 0.0
    %77 = vmatprep.subr.mxu0 0.0
    %78 = vmatpush2.msra.mxu0 0.0
    %79 = vmatprep.subr.mxu0 0.0
    %80 = vmatpush2.msra.mxu0 0.0
    %81 = vmatprep.subr.mxu0 0.0
    %82 = vmatpush2.msra.mxu0 0.0
    %83 = vmatprep.subr.mxu0 0.0
    %84 = vmatpush2.msra.mxu0 0.0
    %85 = vmatprep.subr.mxu0 0.0
    %86 = vmatpush2.msra.mxu0 0.0
    %87 = vmatprep.subr.mxu0 0.0
    %88 = vmatpush2.msra.mxu0 0.0
    %89 = vmatprep.mubr.f32.mxu0 0.0
    %90 = vmatmul.mubr.f32.gmra.mxu0 %v23
    %v91 = vpop.f32.mrf.mxu0
    %v92 = vadd.f32 0.0, %v91
    %v93 = vpop.f32.mrf.mxu0
    %94 = vdwg.mxu0
    %v95 = vmul.f32 %v15, %v15
    %v96 = vsel %vm21, %v95, 0.0
    %97 = vadd.xlane.f32.xlu0 %v96
    %v98 = vpop.xlane.xlu0 %97
    %v99 = vrsqrt.pop %v98
    %v100 = vmul.f32 %v98, %v99
    %vm101 = vcmp.eq.f32.partialorder %v98, inf
    %v102 = vsel %vm101, %v98, %v100
    %vm103 = vcmp.eq.f32.partialorder %v98, 0.0
    %v104 = vand.u32 %v98, 2147483648
    %v105 = vsel %vm103, %v104, %v102
    %v106 = vlaneseq
    %v107 = vand.u32 %v106, 127
    %108 = vset.pattern.permute.xlu0 0
    %109 = vperm.xlu0 %108, %v20
    %v110 = vpop.permute.xlu0 %109
    %vm111 = vcmp.eq.s32.totalorder %v107, %v110
    %v112 = vmul.f32 %v105, 0.4
    %v113 = vsel %vm111, %v112, 0.0
    %v114 = vsub.f32 %v92, %v113
    %vm115 = vcmask 80896
    %116 = vst.msk [vmem:[#allocation2] sm:$0xff] %vm115, %v114
    // Predicated region
    $region14: #{tpu_custom_call.1} parent=1 // pred_check
      _
    $region15: #{tpu_custom_call.1} parent=1 // pred_check_branch
      %118 = sbr.rel (0) target = $region17
    $region16: #{tpu_custom_call.1} parent=1 // pred_region
      %s120 = ssub.s32 128, 128
      %121 = vsyncadd [#allocation3], %s120
      %s123 = sshll.u32 [#allocation2], 4
      %s124 = int_to_ptr.vmem [resolvable:$true] %s123
      %126 = dma.vmem_to_hbm [thread:$0]  %s124, 128, %s3, [#allocation3]
    $region17: #{tpu_custom_call.1} parent=1 // pred_fallthru
      _
    // Predicated region
    $region18: #{tpu_custom_call.1} parent=1 // pred_check
      _
    $region19: #{tpu_custom_call.1} parent=1 // pred_check_branch
      %128 = sbr.rel (0) target = $region21
    $region20: #{tpu_custom_call.1} parent=1 // pred_region
      %129 = dma.done [#allocation3], 128
    $region21: #{tpu_custom_call.1} parent=1 // pred_fallthru
      _
    %130 = vsyncpa [#allocation3], 1

</llo_original>
